<compile_context>
chip_gen: v7x
topology: tpu7x:2x2x1
jax: 0.10.0
libtpu: 0.0.40
codegen_flags: <defaults>
</compile_context>

<pallas_src>
import math

import jax
import jax.numpy as jnp
import numpy as np
from jax import lax
from jax.experimental import pallas as pl
from jax.experimental.pallas import tpu as pltpu


def _round_up(x, m):
    return ((x + m - 1) // m) * m


def _conv_relu_kernel(a_ref, w_ref, b_ref, o_ref):
    # a_ref: (tm, K) bf16 rows of the p=0 conv window
    # w_ref: (tn, K) bf16 conv-weight rows (natural layout, no wrapper transpose)
    # b_ref: (1, tn) f32 bias
    # o_ref: (tm, tn) = relu(A @ W^T + b); f32 accumulate, cast on the store.
    acc = lax.dot_general(
        a_ref[...], w_ref[...],
        dimension_numbers=(((1,), (1,)), ((), ())),
        preferred_element_type=jnp.float32)
    o_ref[...] = jnp.maximum(acc + b_ref[...], 0.0).astype(o_ref.dtype)


def _pick_tiles(m, o):
    # M tile: multiple of 16 (bf16 packs 16 sublanes per vreg); >=2 grid steps
    # when possible so the parallel axis can shard across both v7x TensorCores;
    # capped at 2048 rows to amortize per-step overhead without bloating VMEM.
    if m <= 32:
        tm = m                                      # full-dim block (always legal)
    else:
        tm = min(2048, _round_up(pl.cdiv(m, 2), 16))
    # N tile: split output channels only when cleanly 256-tileable (matches the
    # 2x256x256 MXU on v6e/v7x); otherwise keep the natural O so the output is
    # written exactly (no pad columns, no post-kernel slice).
    tn = 256 if (o > 256 and o % 256 == 0) else o
    return tm, tn


def cnn_forward(x, conv_weight, conv_bias, kernel_size, *, out_dtype=jnp.bfloat16):
    """x: (B, L, C); conv_weight: (O, 1, k, C); conv_bias: (O,). Returns (B, O)."""
    B, L, C = x.shape
    O = conv_weight.shape[0]
    k = kernel_size
    pad = int(math.ceil((k - 1) / 2))

    # Only conv position 0 survives the module's final slice. Its window is
    # `pad` zero rows followed by the first (k - pad) rows of x (clamped to L);
    # the zero rows contribute nothing, so drop them from the contraction.
    n_rows = min(k - pad, L)
    K = n_rows * C

    # Single fused producer pass per operand: slice + reshape + bf16 cast.
    A = x[:, :n_rows, :].reshape(B, K).astype(jnp.bfloat16)                    # (B, K)
    W = conv_weight[:, 0, pad:pad + n_rows, :].reshape(O, K).astype(jnp.bfloat16)  # (O, K)
    b2 = conv_bias.astype(jnp.float32).reshape(1, O)                           # (1, O)

    tm, tn = _pick_tiles(B, O)
    out_bytes = jnp.dtype(out_dtype).itemsize

    def _vmem_need(tm_):
        return (2 * tm_ * K * 2              # double-buffered bf16 A tiles
                + 2 * tm_ * tn * out_bytes   # double-buffered output tiles
                + 2 * tn * K * 2 + 2 * tn * 4)  # weight + bias tiles

    # Keep within the default scoped VMEM budget (and v7x's 64 MiB physical);
    # shrink tm first, only then raise the limit with headroom.
    while _vmem_need(tm) > (24 << 20) and tm > 256:
        tm = _round_up(tm // 2, 16)
    cp = dict(dimension_semantics=("parallel", "parallel"))
    if _vmem_need(tm) > (24 << 20):
        cp["vmem_limit_bytes"] = min(2 * _vmem_need(tm), 48 << 20)

    grid = (pl.cdiv(B, tm), pl.cdiv(O, tn))

    out = pl.pallas_call(
        _conv_relu_kernel,
        out_shape=jax.ShapeDtypeStruct((B, O), out_dtype),
        grid=grid,
        in_specs=[
            pl.BlockSpec((tm, K), lambda i, j: (i, 0)),   # A rows, pipelined over M
            pl.BlockSpec((tn, K), lambda i, j: (j, 0)),   # weight tile
            pl.BlockSpec((1, tn), lambda i, j: (0, j)),   # bias tile
        ],
        out_specs=pl.BlockSpec((tm, tn), lambda i, j: (i, j)),
        compiler_params=pltpu.CompilerParams(**cp),
    )(A, W, b2)
    # MaxPool1d(kernel_size=1) is the identity; nothing left to do.
    return out


def _reference_forward(x, conv_weight, conv_bias, kernel_size):
    """Pure-JAX f32 reference with the original (unreduced) formulation."""
    B, L, C = x.shape
    k = kernel_size
    pad = int(math.ceil((k - 1) / 2))
    x_pad = jnp.pad(x.astype(jnp.float32), ((0, 0), (pad, pad), (0, 0)))
    win0 = x_pad[:, :k, :]                                # p = 0 conv window
    w = conv_weight[:, 0, :, :].astype(jnp.float32)       # (O, k, C)
    conv0 = jnp.einsum("bkc,okc->bo", win0, w) + conv_bias.astype(jnp.float32)
    return jnp.maximum(conv0, 0.0)


if __name__ == "__main__":
    # Small, deterministic configuration consistent with the module's __init__.
    char_emb_size = 8
    word_emb_size = 32
    kernel_size = 5
    batch = 2
    max_word_len = 16

    key = jax.random.PRNGKey(0)
    k_x, k_w, k_b = jax.random.split(key, 3)

    x = jax.random.normal(k_x, (batch, max_word_len, char_emb_size), dtype=jnp.float32)

    # nn.Conv1d(in=1, out=word_emb_size, kernel_size=(k, char_emb_size)) parameters.
    fan_in = 1 * kernel_size * char_emb_size
    bound = 1.0 / math.sqrt(fan_in)
    conv_weight = jax.random.uniform(
        k_w, (word_emb_size, 1, kernel_size, char_emb_size),
        minval=-bound, maxval=bound, dtype=jnp.float32)
    conv_bias = jax.random.uniform(
        k_b, (word_emb_size,), minval=-bound, maxval=bound, dtype=jnp.float32)

    out = cnn_forward(x, conv_weight, conv_bias, kernel_size)
    out = jax.block_until_ready(out)

    ref = _reference_forward(x, conv_weight, conv_bias, kernel_size)
    ref = jax.block_until_ready(ref)

    assert out.shape == (batch, word_emb_size), out.shape
    assert bool(jnp.all(out >= 0.0))  # ReLU output is non-negative
    np.testing.assert_allclose(np.asarray(out).astype(np.float32), np.asarray(ref),
                               rtol=2e-2, atol=2e-2)

    print("KERNEL_OK")
</pallas_src>

<mosaic_0001>
module attributes {stable_mosaic.version = 11 : i64} {
  func.func @_conv_relu_kernel(%arg0: i32, %arg1: i32, %arg2: memref<2x24xbf16, #tpu.memory_space<vmem>>, %arg3: memref<32x24xbf16, #tpu.memory_space<vmem>>, %arg4: memref<1x32xf32, #tpu.memory_space<vmem>>, %arg5: memref<2x32xbf16, #tpu.memory_space<vmem>>) attributes {dimension_semantics = [#tpu.dimension_semantics<parallel>, #tpu.dimension_semantics<parallel>], iteration_bounds = array<i64: 1, 1>, scalar_prefetch = 0 : i64, scratch_operands = 0 : i64, tpu.core_type = #tpu.core_type<tc>, window_params = [{transform_indices = @transform_0, window_bounds = array<i64: 2, 24>}, {transform_indices = @transform_1, window_bounds = array<i64: 32, 24>}, {transform_indices = @transform_2, window_bounds = array<i64: 1, 32>}, {transform_indices = @transform_3, window_bounds = array<i64: 2, 32>}]} {
    %c0 = arith.constant 0 : index
    %c0_0 = arith.constant 0 : index
    %0 = vector.load %arg2[%c0, %c0_0] : memref<2x24xbf16, #tpu.memory_space<vmem>>, vector<2x24xbf16>
    %c0_1 = arith.constant 0 : index
    %c0_2 = arith.constant 0 : index
    %1 = vector.load %arg3[%c0_1, %c0_2] : memref<32x24xbf16, #tpu.memory_space<vmem>>, vector<32x24xbf16>
    %cst = arith.constant dense<0.000000e+00> : vector<2x32xf32>
    %2 = tpu.matmul %0, %1, %cst {dimension_numbers = #tpu.dot_dimension_numbers<[1], [1], [0], [0], [0, 0, 1, 0], [], []>} : vector<2x24xbf16>, vector<32x24xbf16>, vector<2x32xf32> -> vector<2x32xf32>
    %c0_3 = arith.constant 0 : index
    %c0_4 = arith.constant 0 : index
    %3 = vector.load %arg4[%c0_3, %c0_4] : memref<1x32xf32, #tpu.memory_space<vmem>>, vector<1x32xf32>
    %4 = vector.broadcast %3 : vector<1x32xf32> to vector<2x32xf32>
    %5 = arith.addf %2, %4 : vector<2x32xf32>
    %cst_5 = arith.constant 0.000000e+00 : f32
    %6 = vector.broadcast %cst_5 : f32 to vector<2x32xf32>
    %7 = arith.maximumf %5, %6 : vector<2x32xf32>
    %8 = arith.truncf %7 : vector<2x32xf32> to vector<2x32xbf16>
    %c0_6 = arith.constant 0 : index
    %c0_7 = arith.constant 0 : index
    %9 = vector.load %arg5[%c0_6, %c0_7] : memref<2x32xbf16, #tpu.memory_space<vmem>>, vector<2x32xbf16>
    tpu.vector_store %arg5[%c0_6, %c0_7], %8 {strides = array<i32>} : memref<2x32xbf16, #tpu.memory_space<vmem>>, vector<2x32xbf16>,
    return
  }
  func.func @transform_0(%arg0: i32, %arg1: i32) -> (i32, i32) {
    %c0_i32 = arith.constant 0 : i32
    %c0_i32_0 = arith.constant 0 : i32
    return %arg0, %c0_i32 : i32, i32
  }
  func.func @transform_1(%arg0: i32, %arg1: i32) -> (i32, i32) {
    %c0_i32 = arith.constant 0 : i32
    %c0_i32_0 = arith.constant 0 : i32
    return %arg1, %c0_i32 : i32, i32
  }
  func.func @transform_2(%arg0: i32, %arg1: i32) -> (i32, i32) {
    %c0_i32 = arith.constant 0 : i32
    %c0_i32_0 = arith.constant 0 : i32
    return %c0_i32, %arg1 : i32, i32
  }
  func.func @transform_3(%arg0: i32, %arg1: i32) -> (i32, i32) {
    %c0_i32 = arith.constant 0 : i32
    return %arg0, %arg1 : i32, i32
  }
}

</mosaic_0001>

<llo_original>
// kernel: tpu_custom_call.1
$region0: #{tpu_custom_call.1}
  #allocation0 [shape = 'u32[]', space=smem, size = 0x4, offset = 0x4, fixed_abs, tag = 'smem constant byte address 0x4 - core index']
  #allocation1 [shape = 'u32[144,128]{1,0:T(1,128)}', space=vmem, size = 0x12000, scoped, tag = 'internal scratch']
  %s0 = inlined_call_operand.vmem [shape: bf16[2,24], index: 0, kind: input, shape index: {}]
  %s1 = inlined_call_operand.vmem [shape: bf16[32,24], index: 1, kind: input, shape index: {}]
  %s2 = inlined_call_operand.vmem [shape: f32[1,32], index: 2, kind: input, shape index: {}]
  %s3 = inlined_call_operand.hbm [shape: bf16[2,32], index: 3, kind: output, shape index: {}]
  %s4 = sld [smem:[#allocation0]]
  $region22: #{tpu_custom_call.1} parent=0
    _
  %s6 = ssub.s32 1, %s4
  %s7 = scalar_select 0, %s6, %s4
  $region1: #{tpu_custom_call.1} parent=0
    #allocation2 [shape = 'u8[512]{0}', space=vmem, size = 0x400, scoped, tag = 'output window, operand 0, single buffered']
    #allocation3 [shape = 's32[1]{0}', space=sflag, size = 0x4, scoped, tag = 'scoped memory for tpu_custom_call.1']
    %8 = vsyncpa [#allocation3], 0
    // Predicated region
    $region2: #{tpu_custom_call.1} parent=1 // pred_check
      _
    $region3: #{tpu_custom_call.1} parent=1 // pred_check_branch
      %10 = sbr.rel (0) target = $region5
    $region4: #{tpu_custom_call.1} parent=1 // pred_region
      _
    $region5: #{tpu_custom_call.1} parent=1 // pred_fallthru
      _
    // Predicated region
    $region6: #{tpu_custom_call.1} parent=1 // pred_check
      _
    $region7: #{tpu_custom_call.1} parent=1 // pred_check_branch
      %12 = sbr.rel (0) target = $region9
    $region8: #{tpu_custom_call.1} parent=1 // pred_region
      _
    $region9: #{tpu_custom_call.1} parent=1 // pred_fallthru
      _
    // Predicated region
    $region10: #{tpu_custom_call.1} parent=1 // pred_check
      _
    $region11: #{tpu_custom_call.1} parent=1 // pred_check_branch
      %14 = sbr.rel (0) target = $region13
    $region12: #{tpu_custom_call.1} parent=1 // pred_region
      _
    $region13: #{tpu_custom_call.1} parent=1 // pred_fallthru
      _
    %v16 = vld [vmem:[%s0] sm:$0x1]
    %v17 = vld [vmem:[%s1] sm:$0xf]
    %v18 = vld [vmem:[%s1 + $0x4] sm:$0xf]
    %v19 = vld [vmem:[%s1 + $0x8] sm:$0xf]
    %v20 = vld [vmem:[%s1 + $0xc] sm:$0xf]
    %v21 = vld [vmem:[%s2] sm:$0x1]
    %v23 = vlaneseq
    %v24 = vshrl.u32 %v23, 7
    %v25 = vsub.s32 0, %v24
    %v26 = vrot.slane %v21, %v25
    %v32 = vunpack.c.l.b16 %v17
    %v33 = vunpack.c.l.b16 %v18
    %v34 = vunpack.c.l.b16 %v19
    %v35 = vunpack.c.l.b16 %v20
    %v36 = vpack.c.b16 %v33, %v32
    %v37 = vpack.c.b16 %v35, %v34
    %vm38 = vcmask 195584
    %v40 = vsel %vm38, %v16, 0
    %v43 = vsel %vm38, %v36, 0
    %v46 = vsel %vm38, %v37, 0
    %48 = vmatprep.subr.bf16.mxu0 0
    %49 = vmatpush1.bf16.xpose.msra.mxu0 %v43
    %50 = vmatprep.subr.bf16.mxu0 0
    %51 = vmatpush1.bf16.xpose.msra.mxu0 %v46
    %52 = vmatprep.subr.bf16.mxu0 0
    %53 = vmatpush1.bf16.xpose.msra.mxu0 0
    %54 = vmatprep.subr.bf16.mxu0 0
    %55 = vmatpush1.bf16.xpose.msra.mxu0 0
    %56 = vmatprep.subr.bf16.mxu0 0
    %57 = vmatpush1.bf16.xpose.msra.mxu0 0
    %58 = vmatprep.subr.bf16.mxu0 0
    %59 = vmatpush1.bf16.xpose.msra.mxu0 0
    %60 = vmatprep.subr.bf16.mxu0 0
    %61 = vmatpush1.bf16.xpose.msra.mxu0 0
    %62 = vmatprep.subr.bf16.mxu0 0
    %63 = vmatpush1.bf16.xpose.msra.mxu0 0
    %64 = vmatprep.subr.bf16.mxu0 0
    %65 = vmatpush1.bf16.xpose.msra.mxu0 0
    %66 = vmatprep.subr.bf16.mxu0 0
    %67 = vmatpush1.bf16.xpose.msra.mxu0 0
    %68 = vmatprep.subr.bf16.mxu0 0
    %69 = vmatpush1.bf16.xpose.msra.mxu0 0
    %70 = vmatprep.subr.bf16.mxu0 0
    %71 = vmatpush1.bf16.xpose.msra.mxu0 0
    %72 = vmatprep.subr.bf16.mxu0 0
    %73 = vmatpush1.bf16.xpose.msra.mxu0 0
    %74 = vmatprep.subr.bf16.mxu0 0
    %75 = vmatpush1.bf16.xpose.msra.mxu0 0
    %76 = vmatprep.subr.bf16.mxu0 0
    %77 = vmatpush1.bf16.xpose.msra.mxu0 0
    %78 = vmatprep.subr.bf16.mxu0 0
    %79 = vmatpush1.bf16.xpose.msra.mxu0 0
    %80 = vmatprep.mubr.bf16.mxu0 0
    %81 = vmatmul.mubr.bf16.gmra.mrb[0].mxu0 %v40
    %v82 = vpop.f32.mrb[0].mxu0
    %v83 = vadd.f32 %v26, %v82
    %v84 = vpop.f32.mrb[0].mxu0
    %v85 = vpop.f32.mrb[0].mxu0
    %v86 = vpop.f32.mrb[0].mxu0
    %87 = vdwg.mxu0
    %v88 = vmax.f32 %v83, 0.0
    %v89 = vpack.c.bf16 %v88, %v88
    %vm90 = vcmask 253952
    %91 = vst.msk [vmem:[#allocation2] sm:$0x1] %vm90, %v89
    // Predicated region
    $region14: #{tpu_custom_call.1} parent=1 // pred_check
      _
    $region15: #{tpu_custom_call.1} parent=1 // pred_check_branch
      %93 = sbr.rel (0) target = $region17
    $region16: #{tpu_custom_call.1} parent=1 // pred_region
      %s95 = ssub.s32 16, 16
      %96 = vsyncadd [#allocation3], %s95
      %s98 = sshll.u32 [#allocation2], 4
      %s99 = int_to_ptr.vmem [resolvable:$true] %s98
      %101 = dma.vmem_to_hbm [thread:$0]  %s99, 16, %s3, [#allocation3]
    $region17: #{tpu_custom_call.1} parent=1 // pred_fallthru
      _
    // Predicated region
    $region18: #{tpu_custom_call.1} parent=1 // pred_check
      _
    $region19: #{tpu_custom_call.1} parent=1 // pred_check_branch
      %103 = sbr.rel (0) target = $region21
    $region20: #{tpu_custom_call.1} parent=1 // pred_region
      %104 = dma.done [#allocation3], 16
    $region21: #{tpu_custom_call.1} parent=1 // pred_fallthru
      _
    %105 = vsyncpa [#allocation3], 1

</llo_original>
